<compile_context>
chip_gen: v7x
topology: tpu7x:2x2x1
jax: 0.10.0
libtpu: 0.0.40
codegen_flags: <defaults>
</compile_context>

<pallas_src>
import jax
import jax.numpy as jnp
from jax.experimental import pallas as pl
from jax.experimental.pallas import tpu as pltpu


def mlp_kernel(x_ref, w1_ref, b1_ref, w2_ref, b2_ref, o_ref):
    # x_ref:  (tm, in)        input dtype (cast to bf16 in-kernel)
    # w1_ref: (in, t_mid)     bf16   (W1^T mid-tile)
    # b1_ref: (1, t_mid)      f32
    # w2_ref: (t_mid, out_p)  bf16   (W2^T mid-tile)
    # b2_ref: (1, out_p)      f32
    # o_ref:  (tm, out_p)     f32    (resident across the reduction axis)
    j = pl.program_id(1)

    # First matmul: bf16 operands, f32 accumulation on the MXU.
    x = x_ref[...].astype(jnp.bfloat16)
    h = jnp.dot(x, w1_ref[...], preferred_element_type=jnp.float32)
    # Bias + ReLU in f32 (keep elementwise work off bf16 for v5e's VPU).
    h = jnp.maximum(h + b1_ref[...], 0.0)
    # Dropout_variants in eval mode: identity on h.
    # Second matmul: this mid-tile's contribution to the output.
    contrib = jnp.dot(h.astype(jnp.bfloat16), w2_ref[...],
                      preferred_element_type=jnp.float32)

    @pl.when(j == 0)
    def _init():
        o_ref[...] = contrib + b2_ref[...]

    @pl.when(j > 0)
    def _accum():
        o_ref[...] += contrib


def _round_up(x, m):
    return (x + m - 1) // m * m


def _cdiv(a, b):
    return -(-a // b)


def _vmem_capacity_bytes():
    """Per-core VMEM capacity; conservative v7x-sized fallback if unknown."""
    try:
        info = pltpu.get_tpu_info()
        cap = getattr(info, "vmem_capacity_bytes", None)
        if cap:
            return int(cap)
    except Exception:
        pass
    return 64 << 20


def prepare_mlp_params(w1, b1, w2, b2):
    """One-time weight prep (pad + cast) — do this at parameter-load time.

    w1: [in, mid] (= W1^T), b1: [mid], w2: [mid, out] (= W2^T), b2: [out].
    Zero padding is exact: padded W1 columns / b1 entries give h == relu(0)
    == 0, which meets zero-padded W2 rows; padded out columns are sliced off.
    """
    in_size, mid_size = w1.shape
    out_size = w2.shape[1]
    mid_p = _round_up(mid_size, 256)   # 256x256 MXU friendly on v6e/v7x
    out_p = _round_up(out_size, 128)   # lane-dense stores
    w1_p = jnp.pad(w1, ((0, 0), (0, mid_p - mid_size))).astype(jnp.bfloat16)
    w2_p = jnp.pad(w2, ((0, mid_p - mid_size), (0, out_p - out_size))).astype(jnp.bfloat16)
    b1_p = jnp.pad(b1, (0, mid_p - mid_size)).reshape(1, mid_p).astype(jnp.float32)
    b2_p = jnp.pad(b2, (0, out_p - out_size)).reshape(1, out_p).astype(jnp.float32)
    return dict(w1=w1_p, b1=b1_p, w2=w2_p, b2=b2_p,
                in_size=in_size, mid_size=mid_size, out_size=out_size)


def mlp_forward(x, params, *, tile_m=256):
    """x: [B, S, in]; params from prepare_mlp_params."""
    in_size = params["in_size"]
    out_size = params["out_size"]
    w1_p, b1_p, w2_p, b2_p = params["w1"], params["b1"], params["w2"], params["b2"]
    mid_p = w1_p.shape[1]
    out_p = w2_p.shape[1]

    B, S, _ = x.shape
    M = B * S
    x2d = x.reshape(M, in_size)
    x_bytes = jnp.dtype(x.dtype).itemsize

    # ---- Row tile: multiple of 16 (bf16 sublane packing); >=2 tiles when
    # rows allow so the "parallel" M axis can use both v7x TensorCores. ----
    m_rounded = _round_up(M, 16)
    tm = min(_round_up(tile_m, 16), m_rounded)
    if m_rounded // tm < 2 and m_rounded >= 32:
        tm = _round_up(_cdiv(m_rounded, 2), 16)

    # ---- Per-generation VMEM budget. ----
    vmem_cap = _vmem_capacity_bytes()
    budget = int(vmem_cap * 0.75)          # ~48 MiB v7x, ~96 MiB v5e/v6e

    def vmem_estimate(tm_, t_mid_):
        return (2 * tm_ * in_size * x_bytes        # x tile (double-buffered)
                + 2 * in_size * t_mid_ * 2         # W1 tile (bf16)
                + 2 * t_mid_ * 4                   # b1 tile
                + 2 * t_mid_ * out_p * 2           # W2 tile (bf16)
                + 2 * out_p * 4                    # b2 tile
                + 2 * tm_ * out_p * 4              # out tile (f32)
                + tm_ * t_mid_ * 4                 # h (f32 temp)
                + tm_ * t_mid_ * 2                 # h bf16 cast
                + tm_ * in_size * 2)               # x bf16 cast

    # ---- Mid tile: prefer full residency (t_mid == mid_p -> reduction axis
    # collapses to 1 and weights load once); otherwise the largest divisor of
    # mid_p that fits.  Shrink tm before letting t_mid drop below 256. ----
    candidates = [mid_p] + [t for t in (2048, 1024, 512, 256, 128)
                            if t < mid_p and mid_p % t == 0]

    def pick_t_mid(tm_, floor):
        for t in candidates:
            if t >= floor and vmem_estimate(tm_, t) <= budget:
                return t
        return None

    t_mid = pick_t_mid(tm, 256)
    while t_mid is None and tm > 128:
        tm = max(128, _round_up(tm // 2, 16))
        t_mid = pick_t_mid(tm, 256)
    if t_mid is None:
        t_mid = pick_t_mid(tm, 128) or candidates[-1]

    # ---- Row padding only when needed (elided by XLA when M % tm == 0). ----
    M_p = _round_up(M, tm)
    if M_p != M:
        x2d = jnp.pad(x2d, ((0, M_p - M), (0, 0)))

    grid = (M_p // tm, mid_p // t_mid)
    est = vmem_estimate(tm, t_mid)
    vmem_limit = min(max(int(est * 1.5) + (4 << 20), 32 << 20),
                     int(vmem_cap * 0.85))

    out2d = pl.pallas_call(
        mlp_kernel,
        out_shape=jax.ShapeDtypeStruct((M_p, out_p), jnp.float32),
        grid_spec=pltpu.PrefetchScalarGridSpec(
            num_scalar_prefetch=0,
            grid=grid,
            in_specs=[
                pl.BlockSpec((tm, in_size), lambda i, j: (i, 0)),     # x rows
                pl.BlockSpec((in_size, t_mid), lambda i, j: (0, j)),  # W1^T tile
                pl.BlockSpec((1, t_mid), lambda i, j: (0, j)),        # b1 tile
                pl.BlockSpec((t_mid, out_p), lambda i, j: (j, 0)),    # W2^T tile
                pl.BlockSpec((1, out_p), lambda i, j: (0, 0)),        # b2
            ],
            out_specs=pl.BlockSpec((tm, out_p), lambda i, j: (i, 0)),
        ),
        compiler_params=pltpu.CompilerParams(
            dimension_semantics=("parallel", "arbitrary"),
            vmem_limit_bytes=vmem_limit),
    )(x2d, w1_p, b1_p, w2_p, b2_p)

    return out2d[:M, :out_size].reshape(B, S, out_size)


def init_linear_params(key, fan_in, fan_out):
    """Deterministic init matching nn.Linear's U(-1/sqrt(fan_in), 1/sqrt(fan_in)).
    Returns weight already transposed to [fan_in, fan_out]."""
    kw, kb = jax.random.split(key)
    bound = 1.0 / (fan_in ** 0.5)
    w_t = jax.random.uniform(kw, (fan_in, fan_out), jnp.float32, -bound, bound)
    b = jax.random.uniform(kb, (fan_out,), jnp.float32, -bound, bound)
    return w_t, b


if __name__ == "__main__":
    # Small shapes consistent with MLP(in_size, mid_size, out_size) on a
    # [batch, seq, in_size] VQA feature tensor.
    batch, seq = 2, 8
    in_size, mid_size, out_size = 32, 64, 32

    key = jax.random.PRNGKey(0)
    kx, k1, k2 = jax.random.split(key, 3)

    x = jax.random.normal(kx, (batch, seq, in_size), jnp.float32)
    w1_t, b1 = init_linear_params(k1, in_size, mid_size)   # FC.linear
    w2_t, b2 = init_linear_params(k2, mid_size, out_size)  # MLP.linear

    # Weight prep happens ONCE (parameter-load time), not per forward call.
    params = prepare_mlp_params(w1_t, b1, w2_t, b2)
    params = jax.tree_util.tree_map(
        lambda a: jax.block_until_ready(a) if isinstance(a, jax.Array) else a, params)

    out = mlp_forward(x, params)
    out = jax.block_until_ready(out)

    # Pure-JAX reference with matched precision (bf16 matmul operands,
    # f32 accumulate/elementwise): Linear -> ReLU -> identity dropout -> Linear.
    xb = x.reshape(batch * seq, in_size).astype(jnp.bfloat16)
    h_ref = jnp.dot(xb, w1_t.astype(jnp.bfloat16),
                    preferred_element_type=jnp.float32) + b1
    h_ref = jnp.maximum(h_ref, 0.0)
    ref = jnp.dot(h_ref.astype(jnp.bfloat16), w2_t.astype(jnp.bfloat16),
                  preferred_element_type=jnp.float32) + b2
    ref = ref.reshape(batch, seq, out_size)

    assert out.shape == (batch, seq, out_size)
    assert jnp.allclose(out, ref, atol=1e-2, rtol=1e-2), "mismatch vs reference"

    print("KERNEL_OK")
</pallas_src>

<mosaic_0001>
module attributes {stable_mosaic.version = 11 : i64} {
  func.func @mlp_kernel(%arg0: i32, %arg1: i32, %arg2: memref<16x32xf32, #tpu.memory_space<vmem>>, %arg3: memref<32x256xbf16, #tpu.memory_space<vmem>>, %arg4: memref<1x256xf32, #tpu.memory_space<vmem>>, %arg5: memref<256x128xbf16, #tpu.memory_space<vmem>>, %arg6: memref<1x128xf32, #tpu.memory_space<vmem>>, %arg7: memref<16x128xf32, #tpu.memory_space<vmem>>) attributes {dimension_semantics = [#tpu.dimension_semantics<parallel>, #tpu.dimension_semantics<arbitrary>], iteration_bounds = array<i64: 1, 1>, scalar_prefetch = 0 : i64, scratch_operands = 0 : i64, tpu.core_type = #tpu.core_type<tc>, window_params = [{transform_indices = @transform_0, window_bounds = array<i64: 16, 32>}, {transform_indices = @transform_1, window_bounds = array<i64: 32, 256>}, {transform_indices = @transform_2, window_bounds = array<i64: 1, 256>}, {transform_indices = @transform_3, window_bounds = array<i64: 256, 128>}, {pipeline_mode = #tpu.pipeline_mode<synchronous>, transform_indices = @transform_4, window_bounds = array<i64: 1, 128>}, {transform_indices = @transform_5, window_bounds = array<i64: 16, 128>}]} {
    %c0 = arith.constant 0 : index
    %c0_0 = arith.constant 0 : index
    %0 = vector.load %arg2[%c0, %c0_0] : memref<16x32xf32, #tpu.memory_space<vmem>>, vector<16x32xf32>
    %1 = arith.truncf %0 : vector<16x32xf32> to vector<16x32xbf16>
    %c0_1 = arith.constant 0 : index
    %c0_2 = arith.constant 0 : index
    %2 = vector.load %arg3[%c0_1, %c0_2] : memref<32x256xbf16, #tpu.memory_space<vmem>>, vector<32x256xbf16>
    %cst = arith.constant dense<0.000000e+00> : vector<16x256xf32>
    %3 = tpu.matmul %1, %2, %cst {dimension_numbers = #tpu.dot_dimension_numbers<[1], [0], [0], [1], [0, 0, 1, 1], [], []>} : vector<16x32xbf16>, vector<32x256xbf16>, vector<16x256xf32> -> vector<16x256xf32>
    %c0_3 = arith.constant 0 : index
    %c0_4 = arith.constant 0 : index
    %4 = vector.load %arg4[%c0_3, %c0_4] : memref<1x256xf32, #tpu.memory_space<vmem>>, vector<1x256xf32>
    %5 = vector.broadcast %4 : vector<1x256xf32> to vector<16x256xf32>
    %6 = arith.addf %3, %5 : vector<16x256xf32>
    %cst_5 = arith.constant 0.000000e+00 : f32
    %7 = vector.broadcast %cst_5 : f32 to vector<16x256xf32>
    %8 = arith.maximumf %6, %7 : vector<16x256xf32>
    %9 = arith.truncf %8 : vector<16x256xf32> to vector<16x256xbf16>
    %c0_6 = arith.constant 0 : index
    %c0_7 = arith.constant 0 : index
    %10 = vector.load %arg5[%c0_6, %c0_7] : memref<256x128xbf16, #tpu.memory_space<vmem>>, vector<256x128xbf16>
    %cst_8 = arith.constant dense<0.000000e+00> : vector<16x128xf32>
    %11 = tpu.matmul %9, %10, %cst_8 {dimension_numbers = #tpu.dot_dimension_numbers<[1], [0], [0], [1], [0, 0, 1, 1], [], []>} : vector<16x256xbf16>, vector<256x128xbf16>, vector<16x128xf32> -> vector<16x128xf32>
    %c0_i32 = arith.constant 0 : i32
    %12 = arith.cmpi eq, %arg1, %c0_i32 : i32
    %13 = arith.extui %12 : i1 to i32
    %c0_i32_9 = arith.constant 0 : i32
    %14 = arith.cmpi ne, %13, %c0_i32_9 : i32
    scf.if %14 {
      %c0_12 = arith.constant 0 : index
      %c0_13 = arith.constant 0 : index
      %18 = vector.load %arg6[%c0_12, %c0_13] : memref<1x128xf32, #tpu.memory_space<vmem>>, vector<1x128xf32>
      %19 = vector.broadcast %18 : vector<1x128xf32> to vector<16x128xf32>
      %20 = arith.addf %11, %19 : vector<16x128xf32>
      %c0_14 = arith.constant 0 : index
      %c0_15 = arith.constant 0 : index
      %21 = vector.load %arg7[%c0_14, %c0_15] : memref<16x128xf32, #tpu.memory_space<vmem>>, vector<16x128xf32>
      tpu.vector_store %arg7[%c0_14, %c0_15], %20 {strides = array<i32>} : memref<16x128xf32, #tpu.memory_space<vmem>>, vector<16x128xf32>,
    } else {
    }
    %c0_i32_10 = arith.constant 0 : i32
    %15 = arith.cmpi sgt, %arg1, %c0_i32_10 : i32
    %16 = arith.extui %15 : i1 to i32
    %c0_i32_11 = arith.constant 0 : i32
    %17 = arith.cmpi ne, %16, %c0_i32_11 : i32
    scf.if %17 {
      %c0_12 = arith.constant 0 : index
      %c0_13 = arith.constant 0 : index
      %18 = vector.load %arg7[%c0_12, %c0_13] : memref<16x128xf32, #tpu.memory_space<vmem>>, vector<16x128xf32>
      %19 = arith.addf %18, %11 : vector<16x128xf32>
      %c0_14 = arith.constant 0 : index
      %c0_15 = arith.constant 0 : index
      %20 = vector.load %arg7[%c0_14, %c0_15] : memref<16x128xf32, #tpu.memory_space<vmem>>, vector<16x128xf32>
      tpu.vector_store %arg7[%c0_14, %c0_15], %19 {strides = array<i32>} : memref<16x128xf32, #tpu.memory_space<vmem>>, vector<16x128xf32>,
    } else {
    }
    return
  }
  func.func @transform_0(%arg0: i32, %arg1: i32) -> (i32, i32) {
    %c0_i32 = arith.constant 0 : i32
    %c0_i32_0 = arith.constant 0 : i32
    return %arg0, %c0_i32 : i32, i32
  }
  func.func @transform_1(%arg0: i32, %arg1: i32) -> (i32, i32) {
    %c0_i32 = arith.constant 0 : i32
    %c0_i32_0 = arith.constant 0 : i32
    return %c0_i32, %arg1 : i32, i32
  }
  func.func @transform_2(%arg0: i32, %arg1: i32) -> (i32, i32) {
    %c0_i32 = arith.constant 0 : i32
    %c0_i32_0 = arith.constant 0 : i32
    return %c0_i32, %arg1 : i32, i32
  }
  func.func @transform_3(%arg0: i32, %arg1: i32) -> (i32, i32) {
    %c0_i32 = arith.constant 0 : i32
    %c0_i32_0 = arith.constant 0 : i32
    return %arg1, %c0_i32 : i32, i32
  }
  func.func @transform_4(%arg0: i32, %arg1: i32) -> (i32, i32) {
    %c0_i32 = arith.constant 0 : i32
    %c0_i32_0 = arith.constant 0 : i32
    %c0_i32_1 = arith.constant 0 : i32
    return %c0_i32, %c0_i32_0 : i32, i32
  }
  func.func @transform_5(%arg0: i32, %arg1: i32) -> (i32, i32) {
    %c0_i32 = arith.constant 0 : i32
    %c0_i32_0 = arith.constant 0 : i32
    return %arg0, %c0_i32 : i32, i32
  }
}

</mosaic_0001>

<llo_original>
// kernel: tpu_custom_call.1
$region0: #{tpu_custom_call.1}
  #allocation0 [shape = 'u32[]', space=smem, size = 0x4, offset = 0x4, fixed_abs, tag = 'smem constant byte address 0x4 - core index']
  #allocation1 [shape = 'u32[144,128]{1,0:T(1,128)}', space=vmem, size = 0x12000, scoped, tag = 'internal scratch']
  %s0 = inlined_call_operand.hbm [shape: f32[16,32], index: 0, kind: input, shape index: {}]
  %s1 = inlined_call_operand.hbm [shape: bf16[32,256], index: 1, kind: input, shape index: {}]
  %s2 = inlined_call_operand.vmem [shape: f32[1,256], index: 2, kind: input, shape index: {}]
  %s3 = inlined_call_operand.hbm [shape: bf16[256,128], index: 3, kind: input, shape index: {}]
  %s4 = inlined_call_operand.vmem [shape: f32[1,128], index: 4, kind: input, shape index: {}]
  %s5 = inlined_call_operand.hbm [shape: f32[16,128], index: 5, kind: output, shape index: {}]
  %s6 = sld [smem:[#allocation0]]
  $region50: #{tpu_custom_call.1} parent=0
    _
  %s8 = ssub.s32 1, %s6
  %s9 = scalar_select 0, %s8, %s6
  $region1: #{tpu_custom_call.1} parent=0
    #allocation2 [shape = 'u8[8192]{0}', space=vmem, size = 0x2000, scoped, tag = 'input window, operand 0, single buffered']
    #allocation3 [shape = 's32[1]{0}', space=sflag, size = 0x4, scoped, tag = 'scoped memory for tpu_custom_call.1']
    #allocation4 [shape = 's32[1]{0}', space=sflag, size = 0x4, scoped, tag = 'scoped memory for tpu_custom_call.1']
    #allocation5 [shape = 'u8[16384]{0}', space=vmem, size = 0x4000, scoped, tag = 'input window, operand 1, single buffered']
    #allocation6 [shape = 's32[1]{0}', space=sflag, size = 0x4, scoped, tag = 'scoped memory for tpu_custom_call.1']
    #allocation7 [shape = 'u8[65536]{0}', space=vmem, size = 0x10000, scoped, tag = 'input window, operand 3, single buffered']
    #allocation8 [shape = 'u8[8192]{0}', space=vmem, size = 0x2000, scoped, tag = 'output window, operand 0, single buffered']
    %10 = vsyncpa [#allocation3], 0
    %11 = vsyncpa [#allocation6], 0
    %12 = vsyncpa [#allocation4], 0
    // Predicated region
    $region2: #{tpu_custom_call.1} parent=1 // pred_check
      _
    $region3: #{tpu_custom_call.1} parent=1 // pred_check_branch
      %14 = sbr.rel (0) target = $region5
    $region4: #{tpu_custom_call.1} parent=1 // pred_region
      %s16 = ssub.s32 256, 256
      %17 = vsyncadd [#allocation3], %s16
      %s18 = sshll.u32 [#allocation2], 4
      %s19 = int_to_ptr.vmem [resolvable:$true] %s18
      %24 = dma.hbm_to_vmem [thread:$0]  %s0, 256, %s19, [#allocation3], 128, 128, 8
    $region5: #{tpu_custom_call.1} parent=1 // pred_fallthru
      _
    // Predicated region
    $region6: #{tpu_custom_call.1} parent=1 // pred_check
      _
    $region7: #{tpu_custom_call.1} parent=1 // pred_check_branch
      %26 = sbr.rel (0) target = $region9
    $region8: #{tpu_custom_call.1} parent=1 // pred_region
      %s28 = ssub.s32 512, 512
      %29 = vsyncadd [#allocation6], %s28
      %s30 = sshll.u32 [#allocation5], 4
      %s31 = int_to_ptr.vmem [resolvable:$true] %s30
      %36 = dma.hbm_to_vmem [thread:$0]  %s1, 512, %s31, [#allocation6], 128, 128, 8
    $region9: #{tpu_custom_call.1} parent=1 // pred_fallthru
      _
    // Predicated region
    $region10: #{tpu_custom_call.1} parent=1 // pred_check
      _
    $region11: #{tpu_custom_call.1} parent=1 // pred_check_branch
      %38 = sbr.rel (0) target = $region13
    $region12: #{tpu_custom_call.1} parent=1 // pred_region
      _
    $region13: #{tpu_custom_call.1} parent=1 // pred_fallthru
      _
    // Predicated region
    $region14: #{tpu_custom_call.1} parent=1 // pred_check
      _
    $region15: #{tpu_custom_call.1} parent=1 // pred_check_branch
      %40 = sbr.rel (0) target = $region17
    $region16: #{tpu_custom_call.1} parent=1 // pred_region
      %s42 = ssub.s32 2048, 2048
      %43 = vsyncadd [#allocation6], %s42
      %s44 = sshll.u32 [#allocation7], 4
      %s45 = int_to_ptr.vmem [resolvable:$true] %s44
      %50 = dma.hbm_to_vmem [thread:$0]  %s3, 2048, %s45, [#allocation6], 64, 64, 4
    $region17: #{tpu_custom_call.1} parent=1 // pred_fallthru
      _
    // Predicated region
    $region18: #{tpu_custom_call.1} parent=1 // pred_check
      _
    $region19: #{tpu_custom_call.1} parent=1 // pred_check_branch
      %52 = sbr.rel (0) target = $region21
    $region20: #{tpu_custom_call.1} parent=1 // pred_region
      _
    $region21: #{tpu_custom_call.1} parent=1 // pred_fallthru
      _
    // Predicated region
    $region22: #{tpu_custom_call.1} parent=1 // pred_check
      _
    $region23: #{tpu_custom_call.1} parent=1 // pred_check_branch
      %54 = sbr.rel (0) target = $region25
    $region24: #{tpu_custom_call.1} parent=1 // pred_region
      %55 = dma.done [#allocation3], 256
    $region25: #{tpu_custom_call.1} parent=1 // pred_fallthru
      _
    // Predicated region
    $region26: #{tpu_custom_call.1} parent=1 // pred_check
      _
    $region27: #{tpu_custom_call.1} parent=1 // pred_check_branch
      %57 = sbr.rel (0) target = $region29
    $region28: #{tpu_custom_call.1} parent=1 // pred_region
      %58 = dma.done [#allocation6], 512
    $region29: #{tpu_custom_call.1} parent=1 // pred_fallthru
      _
    // Predicated region
    $region30: #{tpu_custom_call.1} parent=1 // pred_check
      _
    $region31: #{tpu_custom_call.1} parent=1 // pred_check_branch
      %60 = sbr.rel (0) target = $region33
    $region32: #{tpu_custom_call.1} parent=1 // pred_region
      %61 = dma.done [#allocation6], 2048
    $region33: #{tpu_custom_call.1} parent=1 // pred_fallthru
      _
    %v63 = vld [vmem:[#allocation2] sm:$0xff]
    %v64 = vld [vmem:[#allocation2 + $0x8] sm:$0xff]
    %v65 = vpack.c.bf16 %v64, %v63
    %v66 = vld [vmem:[#allocation5] sm:$0xff]
    %v67 = vld [vmem:[#allocation5 + $0x8] sm:$0xff]
    %v68 = vld [vmem:[#allocation5 + $0x10] sm:$0xff]
    %v69 = vld [vmem:[#allocation5 + $0x18] sm:$0xff]
    %v70 = vld [vmem:[%s2] sm:$0x3]
    %v72 = vlaneseq
    %v73 = vshrl.u32 %v72, 7
    %v74 = vsub.s32 0, %v73
    %v75 = vrot.slane %v70, %v74
    %v76 = vlaneseq
    %v77 = vshrl.u32 %v76, 7
    %v78 = vsub.s32 1, %v77
    %v79 = vrot.slane %v70, %v78
    %v86 = vunpack.c.l.b16 %v66
    %v87 = vunpack.c.h.b16 %v66
    %v88 = vunpack.c.l.b16 %v67
    %v89 = vunpack.c.h.b16 %v67
    %v90 = vunpack.c.l.b16 %v68
    %v91 = vunpack.c.h.b16 %v68
    %v92 = vunpack.c.l.b16 %v69
    %v93 = vunpack.c.h.b16 %v69
    %v94 = vpack.c.b16 %v88, %v86
    %v95 = vpack.c.b16 %v89, %v87
    %v96 = vpack.c.b16 %v92, %v90
    %v97 = vpack.c.b16 %v93, %v91
    %vm102 = vcmask 261120
    %v104 = vsel %vm102, %v65, 0
    %106 = vmatprep.subr.bf16.mxu0 %v95
    %107 = vmatpush1.bf16.msra.mxu0 %v94
    %108 = vmatprep.subr.bf16.mxu0 %v97
    %109 = vmatpush1.bf16.msra.mxu0 %v96
    %110 = vmatprep.subr.bf16.mxu0 0
    %111 = vmatpush1.bf16.msra.mxu0 0
    %112 = vmatprep.subr.bf16.mxu0 0
    %113 = vmatpush1.bf16.msra.mxu0 0
    %114 = vmatprep.subr.bf16.mxu0 0
    %115 = vmatpush1.bf16.msra.mxu0 0
    %116 = vmatprep.subr.bf16.mxu0 0
    %117 = vmatpush1.bf16.msra.mxu0 0
    %118 = vmatprep.subr.bf16.mxu0 0
    %119 = vmatpush1.bf16.msra.mxu0 0
    %120 = vmatprep.subr.bf16.mxu0 0
    %121 = vmatpush1.bf16.msra.mxu0 0
    %122 = vmatprep.subr.bf16.mxu0 0
    %123 = vmatpush1.bf16.msra.mxu0 0
    %124 = vmatprep.subr.bf16.mxu0 0
    %125 = vmatpush1.bf16.msra.mxu0 0
    %126 = vmatprep.subr.bf16.mxu0 0
    %127 = vmatpush1.bf16.msra.mxu0 0
    %128 = vmatprep.subr.bf16.mxu0 0
    %129 = vmatpush1.bf16.msra.mxu0 0
    %130 = vmatprep.subr.bf16.mxu0 0
    %131 = vmatpush1.bf16.msra.mxu0 0
    %132 = vmatprep.subr.bf16.mxu0 0
    %133 = vmatpush1.bf16.msra.mxu0 0
    %134 = vmatprep.subr.bf16.mxu0 0
    %135 = vmatpush1.bf16.msra.mxu0 0
    %136 = vmatprep.subr.bf16.mxu0 0
    %137 = vmatpush1.bf16.msra.mxu0 0
    %138 = vmatprep.mubr.bf16.mxu0 0
    %139 = vmatmul.mubr.bf16.gmra.mrb[0].mxu0 %v104
    %v140 = vpop.f32.mrb[0].mxu0
    %v141 = vadd.f32 %v75, %v140
    %v142 = vpop.f32.mrb[0].mxu0
    %v143 = vadd.f32 %v79, %v142
    %v144 = vpop.f32.mrb[0].mxu0
    %v145 = vadd.f32 %v75, %v144
    %v146 = vpop.f32.mrb[0].mxu0
    %v147 = vadd.f32 %v79, %v146
    %148 = vdwg.mxu0
    %v149 = vmax.f32 %v141, 0.0
    %v150 = vmax.f32 %v143, 0.0
    %v151 = vmax.f32 %v145, 0.0
    %v152 = vmax.f32 %v147, 0.0
    %v153 = vpack.c.bf16 %v151, %v149
    %v154 = vpack.c.bf16 %v152, %v150
    %v155 = vld [vmem:[#allocation7] sm:$0xf]
    %v156 = vld [vmem:[#allocation7 + $0x4] sm:$0xf]
    %v157 = vld [vmem:[#allocation7 + $0x8] sm:$0xf]
    %v158 = vld [vmem:[#allocation7 + $0xc] sm:$0xf]
    %v159 = vld [vmem:[#allocation7 + $0x10] sm:$0xf]
    %v160 = vld [vmem:[#allocation7 + $0x14] sm:$0xf]
    %v161 = vld [vmem:[#allocation7 + $0x18] sm:$0xf]
    %v162 = vld [vmem:[#allocation7 + $0x1c] sm:$0xf]
    %v163 = vld [vmem:[#allocation7 + $0x20] sm:$0xf]
    %v164 = vld [vmem:[#allocation7 + $0x24] sm:$0xf]
    %v165 = vld [vmem:[#allocation7 + $0x28] sm:$0xf]
    %v166 = vld [vmem:[#allocation7 + $0x2c] sm:$0xf]
    %v167 = vld [vmem:[#allocation7 + $0x30] sm:$0xf]
    %v168 = vld [vmem:[#allocation7 + $0x34] sm:$0xf]
    %v169 = vld [vmem:[#allocation7 + $0x38] sm:$0xf]
    %v170 = vld [vmem:[#allocation7 + $0x3c] sm:$0xf]
    %v171 = vld [vmem:[#allocation7 + $0x40] sm:$0xf]
    %v172 = vld [vmem:[#allocation7 + $0x44] sm:$0xf]
    %v173 = vld [vmem:[#allocation7 + $0x48] sm:$0xf]
    %v174 = vld [vmem:[#allocation7 + $0x4c] sm:$0xf]
    %v175 = vld [vmem:[#allocation7 + $0x50] sm:$0xf]
    %v176 = vld [vmem:[#allocation7 + $0x54] sm:$0xf]
    %v177 = vld [vmem:[#allocation7 + $0x58] sm:$0xf]
    %v178 = vld [vmem:[#allocation7 + $0x5c] sm:$0xf]
    %v179 = vld [vmem:[#allocation7 + $0x60] sm:$0xf]
    %v180 = vld [vmem:[#allocation7 + $0x64] sm:$0xf]
    %v181 = vld [vmem:[#allocation7 + $0x68] sm:$0xf]
    %v182 = vld [vmem:[#allocation7 + $0x6c] sm:$0xf]
    %v183 = vld [vmem:[#allocation7 + $0x70] sm:$0xf]
    %v184 = vld [vmem:[#allocation7 + $0x74] sm:$0xf]
    %v185 = vld [vmem:[#allocation7 + $0x78] sm:$0xf]
    %v186 = vld [vmem:[#allocation7 + $0x7c] sm:$0xf]
    %v219 = vunpack.c.l.b16 %v155
    %v220 = vunpack.c.l.b16 %v156
    %v221 = vunpack.c.l.b16 %v157
    %v222 = vunpack.c.l.b16 %v158
    %v223 = vunpack.c.l.b16 %v159
    %v224 = vunpack.c.l.b16 %v160
    %v225 = vunpack.c.l.b16 %v161
    %v226 = vunpack.c.l.b16 %v162
    %v227 = vunpack.c.l.b16 %v163
    %v228 = vunpack.c.l.b16 %v164
    %v229 = vunpack.c.l.b16 %v165
    %v230 = vunpack.c.l.b16 %v166
    %v231 = vunpack.c.l.b16 %v167
    %v232 = vunpack.c.l.b16 %v168
    %v233 = vunpack.c.l.b16 %v169
    %v234 = vunpack.c.l.b16 %v170
    %v235 = vunpack.c.l.b16 %v171
    %v236 = vunpack.c.l.b16 %v172
    %v237 = vunpack.c.l.b16 %v173
    %v238 = vunpack.c.l.b16 %v174
    %v239 = vunpack.c.l.b16 %v175
    %v240 = vunpack.c.l.b16 %v176
    %v241 = vunpack.c.l.b16 %v177
    %v242 = vunpack.c.l.b16 %v178
    %v243 = vunpack.c.l.b16 %v179
    %v244 = vunpack.c.l.b16 %v180
    %v245 = vunpack.c.l.b16 %v181
    %v246 = vunpack.c.l.b16 %v182
    %v247 = vunpack.c.l.b16 %v183
    %v248 = vunpack.c.l.b16 %v184
    %v249 = vunpack.c.l.b16 %v185
    %v250 = vunpack.c.l.b16 %v186
    %v251 = vpack.c.b16 %v220, %v219
    %v252 = vpack.c.b16 %v222, %v221
    %v253 = vpack.c.b16 %v224, %v223
    %v254 = vpack.c.b16 %v226, %v225
    %v255 = vpack.c.b16 %v228, %v227
    %v256 = vpack.c.b16 %v230, %v229
    %v257 = vpack.c.b16 %v232, %v231
    %v258 = vpack.c.b16 %v234, %v233
    %v259 = vpack.c.b16 %v236, %v235
    %v260 = vpack.c.b16 %v238, %v237
    %v261 = vpack.c.b16 %v240, %v239
    %v262 = vpack.c.b16 %v242, %v241
    %v263 = vpack.c.b16 %v244, %v243
    %v264 = vpack.c.b16 %v246, %v245
    %v265 = vpack.c.b16 %v248, %v247
    %v266 = vpack.c.b16 %v250, %v249
    %283 = vmatprep.subr.bf16.mxu0 0
    %284 = vmatpush1.bf16.msra.mxu0 %v251
    %285 = vmatprep.subr.bf16.mxu0 0
    %286 = vmatpush1.bf16.msra.mxu0 %v252
    %287 = vmatprep.subr.bf16.mxu0 0
    %288 = vmatpush1.bf16.msra.mxu0 %v253
    %289 = vmatprep.subr.bf16.mxu0 0
    %290 = vmatpush1.bf16.msra.mxu0 %v254
    %291 = vmatprep.subr.bf16.mxu0 0
    %292 = vmatpush1.bf16.msra.mxu0 %v255
    %293 = vmatprep.subr.bf16.mxu0 0
    %294 = vmatpush1.bf16.msra.mxu0 %v256
    %295 = vmatprep.subr.bf16.mxu0 0
    %296 = vmatpush1.bf16.msra.mxu0 %v257
    %297 = vmatprep.subr.bf16.mxu0 0
    %298 = vmatpush1.bf16.msra.mxu0 %v258
    %299 = vmatprep.subr.bf16.mxu0 0
    %300 = vmatpush1.bf16.msra.mxu0 %v259
    %301 = vmatprep.subr.bf16.mxu0 0
    %302 = vmatpush1.bf16.msra.mxu0 %v260
    %303 = vmatprep.subr.bf16.mxu0 0
    %304 = vmatpush1.bf16.msra.mxu0 %v261
    %305 = vmatprep.subr.bf16.mxu0 0
    %306 = vmatpush1.bf16.msra.mxu0 %v262
    %307 = vmatprep.subr.bf16.mxu0 0
    %308 = vmatpush1.bf16.msra.mxu0 %v263
    %309 = vmatprep.subr.bf16.mxu0 0
    %310 = vmatpush1.bf16.msra.mxu0 %v264
    %311 = vmatprep.subr.bf16.mxu0 0
    %312 = vmatpush1.bf16.msra.mxu0 %v265
    %313 = vmatprep.subr.bf16.mxu0 0
    %314 = vmatpush1.bf16.msra.mxu0 %v266
    %315 = vmatprep.mubr.bf16.mxu0 %v154
    %316 = vmatmul.mubr.bf16.gmra.mrb[0].mxu0 %v153
    %v317 = vpop.f32.mrb[0].mxu0
    %v318 = vadd.f32 0.0, %v317
    %v319 = vpop.f32.mrb[0].mxu0
    %v320 = vpop.f32.mrb[0].mxu0
    %v321 = vadd.f32 0.0, %v320
    %v322 = vpop.f32.mrb[0].mxu0
    %323 = vdwg.mxu0
    %p324 = scmp.eq.s32.totalorder 0, 0
    // Predicated region
    $region34: #{tpu_custom_call.1} parent=1 // pred_check
      %p325 = pneg %p324
    $region35: #{tpu_custom_call.1} parent=1 // pred_check_branch
      %327 = sbr.rel (%p325) target = $region37
    $region36: #{tpu_custom_call.1} parent=1 // pred_region
      %v328 = vld [vmem:[%s4] sm:$0x1]
      %v330 = vlaneseq
      %v331 = vshrl.u32 %v330, 7
      %v332 = vsub.s32 0, %v331
      %v333 = vrot.slane %v328, %v332
      %v335 = vadd.f32 %v318, %v333
      %v336 = vadd.f32 %v321, %v333
      %337 = vst [vmem:[#allocation8] sm:$0xff] %v335
      %338 = vst [vmem:[#allocation8 + $0x8] sm:$0xff] %v336
    $region37: #{tpu_custom_call.1} parent=1 // pred_fallthru
      _
    %p339 = scmp.gt.s32.totalorder 0, 0
    // Predicated region
    $region38: #{tpu_custom_call.1} parent=1 // pred_check
      %p340 = pneg %p339
    $region39: #{tpu_custom_call.1} parent=1 // pred_check_branch
      %342 = sbr.rel (%p340) target = $region41
    $region40: #{tpu_custom_call.1} parent=1 // pred_region
      %v343 = vld [vmem:[#allocation8] sm:$0xff]
      %v344 = vld [vmem:[#allocation8 + $0x8] sm:$0xff]
      %v345 = vadd.f32 %v343, %v318
      %v346 = vadd.f32 %v344, %v321
      %347 = vst [vmem:[#allocation8] sm:$0xff] %v345
      %348 = vst [vmem:[#allocation8 + $0x8] sm:$0xff] %v346
    $region41: #{tpu_custom_call.1} parent=1 // pred_fallthru
      _
    // Predicated region
    $region42: #{tpu_custom_call.1} parent=1 // pred_check
      _
    $region43: #{tpu_custom_call.1} parent=1 // pred_check_branch
      %350 = sbr.rel (0) target = $region45
    $region44: #{tpu_custom_call.1} parent=1 // pred_region
      %s352 = ssub.s32 256, 256
      %353 = vsyncadd [#allocation4], %s352
      %s354 = sshll.u32 [#allocation8], 4
      %s355 = int_to_ptr.vmem [resolvable:$true] %s354
      %360 = dma.vmem_to_hbm [thread:$0]  %s355, 256, %s5, [#allocation4], 128, 128, 8
    $region45: #{tpu_custom_call.1} parent=1 // pred_fallthru
      _
    // Predicated region
    $region46: #{tpu_custom_call.1} parent=1 // pred_check
      _
    $region47: #{tpu_custom_call.1} parent=1 // pred_check_branch
      %362 = sbr.rel (0) target = $region49
    $region48: #{tpu_custom_call.1} parent=1 // pred_region
      %363 = dma.done [#allocation4], 256
    $region49: #{tpu_custom_call.1} parent=1 // pred_fallthru
      _
    %364 = vsyncpa [#allocation3], 1
    %365 = vsyncpa [#allocation6], 1
    %366 = vsyncpa [#allocation4], 1

</llo_original>
